<compile_context>
chip_gen: v6e
topology: v6e:2x2x1
jax: 0.10.0
libtpu: 0.0.40
codegen_flags: <defaults>
</compile_context>

<pallas_src>
import functools

import jax
import jax.numpy as jnp
from jax.experimental import pallas as pl
from jax.experimental.pallas import tpu as pltpu


def _round_up(x: int, m: int) -> int:
    return ((x + m - 1) // m) * m


# ----------------------------------------------------------------------------
# One-time capability probe: does this jax/Mosaic accept pl.Buffered(1)
# (single-buffered constant operands)?  Falls back cleanly if not.
# ----------------------------------------------------------------------------
_SINGLE_BUFFER_OK = None


def _copy_probe_kernel(x_ref, o_ref):
    o_ref[...] = x_ref[...]


def _single_buffer_supported() -> bool:
    global _SINGLE_BUFFER_OK
    if _SINGLE_BUFFER_OK is None:
        try:
            spec = pl.BlockSpec((8, 128), lambda i: (0, 0),
                                pipeline_mode=pl.Buffered(1))
            fn = pl.pallas_call(
                _copy_probe_kernel,
                out_shape=jax.ShapeDtypeStruct((8, 128), jnp.float32),
                grid=(1,),
                in_specs=[spec],
                out_specs=pl.BlockSpec((8, 128), lambda i: (0, 0)),
            )
            jax.block_until_ready(fn(jnp.zeros((8, 128), jnp.float32)))
            _SINGLE_BUFFER_OK = True
        except Exception:
            _SINGLE_BUFFER_OK = False
    return _SINGLE_BUFFER_OK


def _resident_spec(shape, single_buffer: bool) -> pl.BlockSpec:
    """BlockSpec for a grid-invariant (VMEM-resident) operand."""
    index_map = lambda i: (0,) * len(shape)
    if single_buffer:
        return pl.BlockSpec(shape, index_map, pipeline_mode=pl.Buffered(1))
    return pl.BlockSpec(shape, index_map)


# ----------------------------------------------------------------------------
# Fused MLP kernel: all layers back-to-back on one batch tile; intermediates
# stay in vregs/VMEM, only the final lane-dense tile is stored to HBM.
# ----------------------------------------------------------------------------
def _fused_mlp_kernel(*refs, n_layers: int, slope: float, matmul_dtype):
    """refs = (x_ref, w_0 .. w_{L-1}, b_stack_ref, o_ref)."""
    x_ref = refs[0]
    w_refs = refs[1:1 + n_layers]
    b_ref = refs[1 + n_layers]
    o_ref = refs[2 + n_layers]

    h = x_ref[...]                               # already matmul_dtype (wrapper cast)
    for li in range(n_layers):
        w = w_refs[li][...]                      # [in_pad, out_pad], lane-dense
        od = w.shape[1]
        # MXU matmul: bf16 (or f32) operands, f32 accumulation.
        y = jnp.dot(h, w, preferred_element_type=jnp.float32)
        y = y + b_ref[li:li + 1, 0:od]           # f32 bias, lane-dense slice
        if li < n_layers - 1:                    # final LeakyReLU was popped
            y = jnp.where(y > 0, y, slope * y)   # LeakyReLU(0.2) in f32 (VPU)
            h = y.astype(matmul_dtype)           # back to MXU operand dtype
        else:
            h = y
    o_ref[...] = h.astype(o_ref.dtype)


def _pick_bm(batch: int, block_m: int) -> int:
    """Batch tile: multiple of 8, <= block_m, and >=2 grid steps when B > 8
    so the 'parallel' axis can feed both v7x TensorCores."""
    if batch <= 8:
        return batch
    block_m = max(8, (block_m // 8) * 8)
    half = _round_up((batch + 1) // 2, 8)
    return min(block_m, half)


def distribution_discriminator(x, params, *, slope: float = 0.2,
                               block_m: int = 1024,
                               matmul_dtype=jnp.bfloat16,
                               out_dtype=None,
                               return_padded: bool = False):
    """x: [B, hiddens[0]]; params: list of (W [in,out], b [out]).

    Returns [B, hiddens[-1]] in x.dtype by default (PyTorch semantics).
    Set out_dtype=jnp.bfloat16 and/or return_padded=True to cut the final HBM
    write / the wrapper-side slice copy for the fast path.
    """
    B, in_dim = x.shape
    L = len(params)
    out_dim = params[-1][0].shape[1]
    out_dtype = x.dtype if out_dtype is None else out_dtype

    # ---- parameter prep: zero-pad every layer's width to a 128 multiple ----
    true_out = [w.shape[1] for w, _ in params]
    pad_out = [_round_up(d, 128) for d in true_out]
    out_pad = pad_out[-1]
    max_w = max(pad_out)

    ws, bias_rows = [], []
    for li, (w, b) in enumerate(params):
        w = jnp.asarray(w)
        b = jnp.asarray(b).reshape(-1)
        in_true, o_true = w.shape
        in_tgt = pad_out[li - 1] if li > 0 else in_true   # match padded prev act
        w = jnp.pad(w, ((0, in_tgt - in_true), (0, pad_out[li] - o_true)))
        b = jnp.pad(b, (0, pad_out[li] - o_true))
        ws.append(w.astype(matmul_dtype))
        bias_rows.append(jnp.pad(b, (0, max_w - b.shape[0])).astype(jnp.float32))
    b_stack = jnp.stack(bias_rows, axis=0)                 # [L, max_w] f32

    x_in = x.astype(matmul_dtype)                          # wrapper-side cast

    # ---- grid / tiling ----
    bm = _pick_bm(B, block_m)
    grid = (pl.cdiv(B, bm),)

    single_buf = _single_buffer_supported()

    # ---- explicit VMEM budget (clamped to 64 MiB: valid on v7x too) ----
    p_item = jnp.dtype(matmul_dtype).itemsize
    param_bytes = sum(int(w.size) for w in ws) * p_item + int(b_stack.size) * 4
    buf_count = 1 if single_buf else 2
    x_tile = bm * _round_up(in_dim, 128) * p_item
    o_tile = bm * out_pad * jnp.dtype(out_dtype).itemsize
    act_bytes = bm * max_w * 4 * 2                         # f32 intermediates
    est = param_bytes * buf_count + 2 * (x_tile + o_tile) + act_bytes + (4 << 20)
    vmem_limit = int(min(64 << 20, max(32 << 20, est)))

    kernel = functools.partial(_fused_mlp_kernel, n_layers=L, slope=slope,
                               matmul_dtype=matmul_dtype)

    in_specs = [pl.BlockSpec((bm, in_dim), lambda i: (i, 0))]
    for w in ws:
        in_specs.append(_resident_spec(w.shape, single_buf))     # VMEM-resident
    in_specs.append(_resident_spec(b_stack.shape, single_buf))   # VMEM-resident

    out = pl.pallas_call(
        kernel,
        out_shape=jax.ShapeDtypeStruct((B, out_pad), out_dtype),
        grid_spec=pl.GridSpec(
            grid=grid,
            in_specs=in_specs,
            out_specs=pl.BlockSpec((bm, out_pad), lambda i: (i, 0)),
        ),
        compiler_params=pltpu.CompilerParams(
            dimension_semantics=("parallel",),
            vmem_limit_bytes=vmem_limit,
        ),
    )(x_in, *ws, b_stack)

    if return_padded:
        return out
    return out[:, :out_dim]


def init_params(key, hiddens):
    """PyTorch nn.Linear default init: U(-1/sqrt(fan_in), 1/sqrt(fan_in)).
    Weights stored as [in_dim, out_dim] (PyTorch weight.T) so y = x @ W + b."""
    params = []
    for in_dim, out_dim in zip(hiddens[:-1], hiddens[1:]):
        key, kw, kb = jax.random.split(key, 3)
        bound = 1.0 / jnp.sqrt(in_dim)
        w = jax.random.uniform(kw, (in_dim, out_dim), jnp.float32, -bound, bound)
        b = jax.random.uniform(kb, (out_dim,), jnp.float32, -bound, bound)
        params.append((w, b))
    return params


def reference(x, params, slope: float = 0.2):
    """Pure-JAX f32 reference for verification."""
    L = len(params)
    out = x
    for li, (w, b) in enumerate(params):
        out = out @ w + b.reshape(1, -1)
        if li < L - 1:
            out = jnp.where(out > 0, out, slope * out)
    return out


if __name__ == "__main__":
    hiddens = [16, 32, 32, 8]
    batch = 8

    key = jax.random.PRNGKey(0)
    key, kx = jax.random.split(key)
    x = jax.random.normal(kx, (batch, hiddens[0]), jnp.float32)
    params = init_params(key, hiddens)
    ref = reference(x, params)

    # 1) Default fast path: bf16 MXU operands, f32 accumulation + LeakyReLU.
    out = jax.block_until_ready(distribution_discriminator(x, params))
    assert out.shape == (batch, hiddens[-1])
    assert jnp.allclose(out, ref, atol=5e-2, rtol=5e-2), "bf16 mismatch vs reference"

    # 2) Exact f32 MXU path.
    out_f32 = jax.block_until_ready(
        distribution_discriminator(x, params, matmul_dtype=jnp.float32))
    assert jnp.allclose(out_f32, ref, atol=1e-5, rtol=1e-5), "f32 mismatch vs reference"

    # 3) Larger batch: multiple (and partial-tail) tiles across the parallel axis.
    key, kx2 = jax.random.split(key)
    x_big = jax.random.normal(kx2, (300, hiddens[0]), jnp.float32)
    out_big = jax.block_until_ready(
        distribution_discriminator(x_big, params, block_m=128,
                                   matmul_dtype=jnp.float32))
    ref_big = reference(x_big, params)
    assert out_big.shape == (300, hiddens[-1])
    assert jnp.allclose(out_big, ref_big, atol=1e-5, rtol=1e-5), "tiled mismatch vs reference"

    # 4) Padded bf16-output fast path (consumer slices; padded lanes exactly 0).
    out_padded = jax.block_until_ready(
        distribution_discriminator(x, params, out_dtype=jnp.bfloat16,
                                   return_padded=True))
    assert out_padded.shape[1] % 128 == 0
    assert jnp.allclose(out_padded[:, :hiddens[-1]].astype(jnp.float32), ref,
                        atol=5e-2, rtol=5e-2), "padded-output mismatch vs reference"
    assert jnp.all(out_padded[:, hiddens[-1]:] == 0), "padding lanes not zero"

    print("KERNEL_OK")
</pallas_src>

<mosaic_0001>
module attributes {stable_mosaic.version = 11 : i64} {
  func.func @_copy_probe_kernel(%arg0: i32, %arg1: memref<8x128xf32, #tpu.memory_space<vmem>>, %arg2: memref<8x128xf32, #tpu.memory_space<vmem>>) attributes {dimension_semantics = [#tpu.dimension_semantics<arbitrary>], iteration_bounds = array<i64: 1>, scalar_prefetch = 0 : i64, scratch_operands = 0 : i64, tpu.core_type = #tpu.core_type<tc>, window_params = [{pipeline_mode = #tpu.pipeline_mode<synchronous>, transform_indices = @transform_0, window_bounds = array<i64: 8, 128>}, {pipeline_mode = #tpu.pipeline_mode<synchronous>, transform_indices = @transform_1, window_bounds = array<i64: 8, 128>}]} {
    %c0 = arith.constant 0 : index
    %c0_0 = arith.constant 0 : index
    %0 = vector.load %arg1[%c0, %c0_0] : memref<8x128xf32, #tpu.memory_space<vmem>>, vector<8x128xf32>
    %c0_1 = arith.constant 0 : index
    %c0_2 = arith.constant 0 : index
    %1 = vector.load %arg2[%c0_1, %c0_2] : memref<8x128xf32, #tpu.memory_space<vmem>>, vector<8x128xf32>
    tpu.vector_store %arg2[%c0_1, %c0_2], %0 {strides = array<i32>} : memref<8x128xf32, #tpu.memory_space<vmem>>, vector<8x128xf32>,
    return
  }
  func.func @transform_0(%arg0: i32) -> (i32, i32) {
    %c0_i32 = arith.constant 0 : i32
    %c0_i32_0 = arith.constant 0 : i32
    %c0_i32_1 = arith.constant 0 : i32
    return %c0_i32, %c0_i32_0 : i32, i32
  }
  func.func @transform_1(%arg0: i32) -> (i32, i32) {
    %c0_i32 = arith.constant 0 : i32
    %c0_i32_0 = arith.constant 0 : i32
    %c0_i32_1 = arith.constant 0 : i32
    return %c0_i32, %c0_i32_0 : i32, i32
  }
}

module attributes {stable_mosaic.version = 11 : i64} {
  func.func @_fused_mlp_kernel(%arg0: i32, %arg1: memref<8x16xbf16, #tpu.memory_space<vmem>>, %arg2: memref<16x128xbf16, #tpu.memory_space<vmem>>, %arg3: memref<128x128xbf16, #tpu.memory_space<vmem>>, %arg4: memref<128x128xbf16, #tpu.memory_space<vmem>>, %arg5: memref<3x128xf32, #tpu.memory_space<vmem>>, %arg6: memref<8x128xf32, #tpu.memory_space<vmem>>) attributes {dimension_semantics = [#tpu.dimension_semantics<parallel>], iteration_bounds = array<i64: 1>, scalar_prefetch = 0 : i64, scratch_operands = 0 : i64, tpu.core_type = #tpu.core_type<tc>, window_params = [{transform_indices = @transform_0, window_bounds = array<i64: 8, 16>}, {pipeline_mode = #tpu.pipeline_mode<synchronous>, transform_indices = @transform_1, window_bounds = array<i64: 16, 128>}, {pipeline_mode = #tpu.pipeline_mode<synchronous>, transform_indices = @transform_2, window_bounds = array<i64: 128, 128>}, {pipeline_mode = #tpu.pipeline_mode<synchronous>, transform_indices = @transform_3, window_bounds = array<i64: 128, 128>}, {pipeline_mode = #tpu.pipeline_mode<synchronous>, transform_indices = @transform_4, window_bounds = array<i64: 3, 128>}, {transform_indices = @transform_5, window_bounds = array<i64: 8, 128>}]} {
    %c0 = arith.constant 0 : index
    %c0_0 = arith.constant 0 : index
    %0 = vector.load %arg1[%c0, %c0_0] : memref<8x16xbf16, #tpu.memory_space<vmem>>, vector<8x16xbf16>
    %c0_1 = arith.constant 0 : index
    %c0_2 = arith.constant 0 : index
    %1 = vector.load %arg2[%c0_1, %c0_2] : memref<16x128xbf16, #tpu.memory_space<vmem>>, vector<16x128xbf16>
    %cst = arith.constant dense<0.000000e+00> : vector<8x128xf32>
    %2 = tpu.matmul %0, %1, %cst {dimension_numbers = #tpu.dot_dimension_numbers<[1], [0], [0], [1], [0, 0, 1, 1], [], []>} : vector<8x16xbf16>, vector<16x128xbf16>, vector<8x128xf32> -> vector<8x128xf32>
    %c0_3 = arith.constant 0 : index
    %c0_4 = arith.constant 0 : index
    %3 = vector.load %arg5[%c0_3, %c0_4] : memref<3x128xf32, #tpu.memory_space<vmem>>, vector<1x128xf32>
    %4 = vector.broadcast %3 : vector<1x128xf32> to vector<8x128xf32>
    %5 = arith.addf %2, %4 : vector<8x128xf32>
    %cst_5 = arith.constant 0.000000e+00 : f32
    %6 = vector.broadcast %cst_5 : f32 to vector<8x128xf32>
    %7 = arith.cmpf ogt, %5, %6 : vector<8x128xf32>
    %cst_6 = arith.constant 2.000000e-01 : f32
    %8 = vector.broadcast %cst_6 : f32 to vector<8x128xf32>
    %9 = arith.mulf %8, %5 : vector<8x128xf32>
    %10 = arith.select %7, %5, %9 : vector<8x128xi1>, vector<8x128xf32>
    %11 = arith.truncf %10 : vector<8x128xf32> to vector<8x128xbf16>
    %c0_7 = arith.constant 0 : index
    %c0_8 = arith.constant 0 : index
    %12 = vector.load %arg3[%c0_7, %c0_8] : memref<128x128xbf16, #tpu.memory_space<vmem>>, vector<128x128xbf16>
    %cst_9 = arith.constant dense<0.000000e+00> : vector<8x128xf32>
    %13 = tpu.matmul %11, %12, %cst_9 {dimension_numbers = #tpu.dot_dimension_numbers<[1], [0], [0], [1], [0, 0, 1, 1], [], []>} : vector<8x128xbf16>, vector<128x128xbf16>, vector<8x128xf32> -> vector<8x128xf32>
    %c1 = arith.constant 1 : index
    %c0_10 = arith.constant 0 : index
    %14 = vector.load %arg5[%c1, %c0_10] : memref<3x128xf32, #tpu.memory_space<vmem>>, vector<1x128xf32>
    %15 = vector.broadcast %14 : vector<1x128xf32> to vector<8x128xf32>
    %16 = arith.addf %13, %15 : vector<8x128xf32>
    %cst_11 = arith.constant 0.000000e+00 : f32
    %17 = vector.broadcast %cst_11 : f32 to vector<8x128xf32>
    %18 = arith.cmpf ogt, %16, %17 : vector<8x128xf32>
    %cst_12 = arith.constant 2.000000e-01 : f32
    %19 = vector.broadcast %cst_12 : f32 to vector<8x128xf32>
    %20 = arith.mulf %19, %16 : vector<8x128xf32>
    %21 = arith.select %18, %16, %20 : vector<8x128xi1>, vector<8x128xf32>
    %22 = arith.truncf %21 : vector<8x128xf32> to vector<8x128xbf16>
    %c0_13 = arith.constant 0 : index
    %c0_14 = arith.constant 0 : index
    %23 = vector.load %arg4[%c0_13, %c0_14] : memref<128x128xbf16, #tpu.memory_space<vmem>>, vector<128x128xbf16>
    %cst_15 = arith.constant dense<0.000000e+00> : vector<8x128xf32>
    %24 = tpu.matmul %22, %23, %cst_15 {dimension_numbers = #tpu.dot_dimension_numbers<[1], [0], [0], [1], [0, 0, 1, 1], [], []>} : vector<8x128xbf16>, vector<128x128xbf16>, vector<8x128xf32> -> vector<8x128xf32>
    %c2 = arith.constant 2 : index
    %c0_16 = arith.constant 0 : index
    %25 = vector.load %arg5[%c2, %c0_16] : memref<3x128xf32, #tpu.memory_space<vmem>>, vector<1x128xf32>
    %26 = vector.broadcast %25 : vector<1x128xf32> to vector<8x128xf32>
    %27 = arith.addf %24, %26 : vector<8x128xf32>
    %c0_17 = arith.constant 0 : index
    %c0_18 = arith.constant 0 : index
    %28 = vector.load %arg6[%c0_17, %c0_18] : memref<8x128xf32, #tpu.memory_space<vmem>>, vector<8x128xf32>
    tpu.vector_store %arg6[%c0_17, %c0_18], %27 {strides = array<i32>} : memref<8x128xf32, #tpu.memory_space<vmem>>, vector<8x128xf32>,
    return
  }
  func.func @transform_0(%arg0: i32) -> (i32, i32) {
    %c0_i32 = arith.constant 0 : i32
    %c0_i32_0 = arith.constant 0 : i32
    return %arg0, %c0_i32 : i32, i32
  }
  func.func @transform_1(%arg0: i32) -> (i32, i32) {
    %c0_i32 = arith.constant 0 : i32
    %c0_i32_0 = arith.constant 0 : i32
    %c0_i32_1 = arith.constant 0 : i32
    return %c0_i32, %c0_i32_0 : i32, i32
  }
  func.func @transform_2(%arg0: i32) -> (i32, i32) {
    %c0_i32 = arith.constant 0 : i32
    %c0_i32_0 = arith.constant 0 : i32
    %c0_i32_1 = arith.constant 0 : i32
    return %c0_i32, %c0_i32_0 : i32, i32
  }
  func.func @transform_3(%arg0: i32) -> (i32, i32) {
    %c0_i32 = arith.constant 0 : i32
    %c0_i32_0 = arith.constant 0 : i32
    %c0_i32_1 = arith.constant 0 : i32
    return %c0_i32, %c0_i32_0 : i32, i32
  }
  func.func @transform_4(%arg0: i32) -> (i32, i32) {
    %c0_i32 = arith.constant 0 : i32
    %c0_i32_0 = arith.constant 0 : i32
    %c0_i32_1 = arith.constant 0 : i32
    return %c0_i32, %c0_i32_0 : i32, i32
  }
  func.func @transform_5(%arg0: i32) -> (i32, i32) {
    %c0_i32 = arith.constant 0 : i32
    %c0_i32_0 = arith.constant 0 : i32
    return %arg0, %c0_i32 : i32, i32
  }
}

</mosaic_0001>

<llo_original>
// kernel: tpu_custom_call.1
$region0: #{tpu_custom_call.1}
  #allocation0 [shape = 'u32[]', space=smem, size = 0x4, offset = 0x4, fixed_abs, tag = 'smem constant byte address 0x4 - core index']
  #allocation1 [shape = 'u32[144,128]{1,0:T(1,128)}', space=vmem, size = 0x12000, scoped, tag = 'internal scratch']
  %s0 = inlined_call_operand.hbm [shape: f32[8,128], index: 0, kind: input, shape index: {}]
  %s1 = inlined_call_operand.hbm [shape: f32[8,128], index: 1, kind: output, shape index: {}]
  %s2 = sld [smem:[#allocation0]]
  $region18: #{tpu_custom_call.1} parent=0
    _
  %s4 = ssub.s32 1, %s2
  %s5 = scalar_select 0, %s4, %s2
  $region1: #{tpu_custom_call.1} parent=0
    #allocation2 [shape = 'u8[4096]{0}', space=vmem, size = 0x1000, scoped, tag = 'input window, operand 0, single buffered']
    #allocation3 [shape = 's32[1]{0}', space=sflag, size = 0x4, scoped, tag = 'scoped memory for tpu_custom_call.1']
    #allocation4 [shape = 's32[1]{0}', space=sflag, size = 0x4, scoped, tag = 'scoped memory for tpu_custom_call.1']
    #allocation5 [shape = 'u8[4096]{0}', space=vmem, size = 0x1000, scoped, tag = 'output window, operand 0, single buffered']
    %6 = vsyncpa [#allocation3], 0
    %7 = vsyncpa [#allocation4], 0
    // Predicated region
    $region2: #{tpu_custom_call.1} parent=1 // pred_check
      _
    $region3: #{tpu_custom_call.1} parent=1 // pred_check_branch
      %9 = sbr.rel (0) target = $region5
    $region4: #{tpu_custom_call.1} parent=1 // pred_region
      %s11 = ssub.s32 128, 128
      %12 = vsyncadd [#allocation3], %s11
      %s14 = sshll.u32 [#allocation2], 4
      %s15 = int_to_ptr.vmem [resolvable:$true] %s14
      %17 = dma.hbm_to_vmem [thread:$0]  %s0, 128, %s15, [#allocation3]
    $region5: #{tpu_custom_call.1} parent=1 // pred_fallthru
      _
    // Predicated region
    $region6: #{tpu_custom_call.1} parent=1 // pred_check
      _
    $region7: #{tpu_custom_call.1} parent=1 // pred_check_branch
      %19 = sbr.rel (0) target = $region9
    $region8: #{tpu_custom_call.1} parent=1 // pred_region
      %20 = dma.done [#allocation3], 128
    $region9: #{tpu_custom_call.1} parent=1 // pred_fallthru
      _
    %v21 = vld [vmem:[#allocation2] sm:$0xff]
    %22 = vst [vmem:[#allocation5] sm:$0xff] %v21
    // Predicated region
    $region10: #{tpu_custom_call.1} parent=1 // pred_check
      _
    $region11: #{tpu_custom_call.1} parent=1 // pred_check_branch
      %24 = sbr.rel (0) target = $region13
    $region12: #{tpu_custom_call.1} parent=1 // pred_region
      %s26 = ssub.s32 128, 128
      %27 = vsyncadd [#allocation4], %s26
      %s29 = sshll.u32 [#allocation5], 4
      %s30 = int_to_ptr.vmem [resolvable:$true] %s29
      %32 = dma.vmem_to_hbm [thread:$0]  %s30, 128, %s1, [#allocation4]
    $region13: #{tpu_custom_call.1} parent=1 // pred_fallthru
      _
    // Predicated region
    $region14: #{tpu_custom_call.1} parent=1 // pred_check
      _
    $region15: #{tpu_custom_call.1} parent=1 // pred_check_branch
      %34 = sbr.rel (0) target = $region17
    $region16: #{tpu_custom_call.1} parent=1 // pred_region
      %35 = dma.done [#allocation4], 128
    $region17: #{tpu_custom_call.1} parent=1 // pred_fallthru
      _
    %36 = vsyncpa [#allocation3], 1
    %37 = vsyncpa [#allocation4], 1

// kernel: tpu_custom_call.1
$region0: #{tpu_custom_call.1}
  #allocation0 [shape = 'u32[]', space=smem, size = 0x4, offset = 0x4, fixed_abs, tag = 'smem constant byte address 0x4 - core index']
  #allocation1 [shape = 'u32[144,128]{1,0:T(1,128)}', space=vmem, size = 0x12000, scoped, tag = 'internal scratch']
  %s0 = inlined_call_operand.hbm [shape: bf16[8,16], index: 0, kind: input, shape index: {}]
  %s1 = inlined_call_operand.hbm [shape: bf16[16,128], index: 1, kind: input, shape index: {}]
  %s2 = inlined_call_operand.hbm [shape: bf16[128,128], index: 2, kind: input, shape index: {}]
  %s3 = inlined_call_operand.hbm [shape: bf16[128,128], index: 3, kind: input, shape index: {}]
  %s4 = inlined_call_operand.vmem [shape: f32[3,128], index: 4, kind: input, shape index: {}]
  %s5 = inlined_call_operand.hbm [shape: f32[8,128], index: 5, kind: output, shape index: {}]
  %s6 = sld [smem:[#allocation0]]
  $region46: #{tpu_custom_call.1} parent=0
    _
  %s8 = ssub.s32 1, %s6
  %s9 = scalar_select 0, %s8, %s6
  $region1: #{tpu_custom_call.1} parent=0
    #allocation2 [shape = 'u8[2048]{0}', space=vmem, size = 0x800, scoped, tag = 'input window, operand 0, single buffered']
    #allocation3 [shape = 's32[1]{0}', space=sflag, size = 0x4, scoped, tag = 'scoped memory for tpu_custom_call.1']
    #allocation4 [shape = 's32[1]{0}', space=sflag, size = 0x4, scoped, tag = 'scoped memory for tpu_custom_call.1']
    #allocation5 [shape = 'u8[4096]{0}', space=vmem, size = 0x1000, scoped, tag = 'input window, operand 1, single buffered']
    #allocation6 [shape = 's32[1]{0}', space=sflag, size = 0x4, scoped, tag = 'scoped memory for tpu_custom_call.1']
    #allocation7 [shape = 'u8[32768]{0}', space=vmem, size = 0x8000, scoped, tag = 'input window, operand 2, single buffered']
    #allocation8 [shape = 'u8[32768]{0}', space=vmem, size = 0x8000, scoped, tag = 'input window, operand 3, single buffered']
    #allocation9 [shape = 's32[1]{0}', space=sflag, size = 0x4, scoped, tag = 'scoped memory for tpu_custom_call.1']
    #allocation10 [shape = 'u8[4096]{0}', space=vmem, size = 0x1000, scoped, tag = 'output window, operand 0, single buffered']
    %10 = vsyncpa [#allocation3], 0
    %11 = vsyncpa [#allocation6], 0
    %12 = vsyncpa [#allocation9], 0
    %13 = vsyncpa [#allocation4], 0
    // Predicated region
    $region2: #{tpu_custom_call.1} parent=1 // pred_check
      _
    $region3: #{tpu_custom_call.1} parent=1 // pred_check_branch
      %15 = sbr.rel (0) target = $region5
    $region4: #{tpu_custom_call.1} parent=1 // pred_region
      %s17 = ssub.s32 64, 64
      %18 = vsyncadd [#allocation3], %s17
      %s20 = sshll.u32 [#allocation2], 4
      %s21 = int_to_ptr.vmem [resolvable:$true] %s20
      %23 = dma.hbm_to_vmem [thread:$0]  %s0, 64, %s21, [#allocation3]
    $region5: #{tpu_custom_call.1} parent=1 // pred_fallthru
      _
    // Predicated region
    $region6: #{tpu_custom_call.1} parent=1 // pred_check
      _
    $region7: #{tpu_custom_call.1} parent=1 // pred_check_branch
      %25 = sbr.rel (0) target = $region9
    $region8: #{tpu_custom_call.1} parent=1 // pred_region
      %s27 = ssub.s32 128, 128
      %28 = vsyncadd [#allocation6], %s27
      %s29 = sshll.u32 [#allocation5], 4
      %s30 = int_to_ptr.vmem [resolvable:$true] %s29
      %35 = dma.hbm_to_vmem [thread:$0]  %s1, 128, %s30, [#allocation6], 64, 64, 4
    $region9: #{tpu_custom_call.1} parent=1 // pred_fallthru
      _
    // Predicated region
    $region10: #{tpu_custom_call.1} parent=1 // pred_check
      _
    $region11: #{tpu_custom_call.1} parent=1 // pred_check_branch
      %37 = sbr.rel (0) target = $region13
    $region12: #{tpu_custom_call.1} parent=1 // pred_region
      %s39 = ssub.s32 1024, 1024
      %40 = vsyncadd [#allocation6], %s39
      %s41 = sshll.u32 [#allocation7], 4
      %s42 = int_to_ptr.vmem [resolvable:$true] %s41
      %47 = dma.hbm_to_vmem [thread:$0]  %s2, 1024, %s42, [#allocation6], 64, 64, 4
    $region13: #{tpu_custom_call.1} parent=1 // pred_fallthru
      _
    // Predicated region
    $region14: #{tpu_custom_call.1} parent=1 // pred_check
      _
    $region15: #{tpu_custom_call.1} parent=1 // pred_check_branch
      %49 = sbr.rel (0) target = $region17
    $region16: #{tpu_custom_call.1} parent=1 // pred_region
      %s51 = ssub.s32 1024, 1024
      %52 = vsyncadd [#allocation9], %s51
      %s53 = sshll.u32 [#allocation8], 4
      %s54 = int_to_ptr.vmem [resolvable:$true] %s53
      %59 = dma.hbm_to_vmem [thread:$0]  %s3, 1024, %s54, [#allocation9], 64, 64, 4
    $region17: #{tpu_custom_call.1} parent=1 // pred_fallthru
      _
    // Predicated region
    $region18: #{tpu_custom_call.1} parent=1 // pred_check
      _
    $region19: #{tpu_custom_call.1} parent=1 // pred_check_branch
      %61 = sbr.rel (0) target = $region21
    $region20: #{tpu_custom_call.1} parent=1 // pred_region
      _
    $region21: #{tpu_custom_call.1} parent=1 // pred_fallthru
      _
    // Predicated region
    $region22: #{tpu_custom_call.1} parent=1 // pred_check
      _
    $region23: #{tpu_custom_call.1} parent=1 // pred_check_branch
      %63 = sbr.rel (0) target = $region25
    $region24: #{tpu_custom_call.1} parent=1 // pred_region
      %64 = dma.done [#allocation3], 64
    $region25: #{tpu_custom_call.1} parent=1 // pred_fallthru
      _
    // Predicated region
    $region26: #{tpu_custom_call.1} parent=1 // pred_check
      _
    $region27: #{tpu_custom_call.1} parent=1 // pred_check_branch
      %66 = sbr.rel (0) target = $region29
    $region28: #{tpu_custom_call.1} parent=1 // pred_region
      %67 = dma.done [#allocation6], 128
    $region29: #{tpu_custom_call.1} parent=1 // pred_fallthru
      _
    // Predicated region
    $region30: #{tpu_custom_call.1} parent=1 // pred_check
      _
    $region31: #{tpu_custom_call.1} parent=1 // pred_check_branch
      %69 = sbr.rel (0) target = $region33
    $region32: #{tpu_custom_call.1} parent=1 // pred_region
      %70 = dma.done [#allocation6], 1024
    $region33: #{tpu_custom_call.1} parent=1 // pred_fallthru
      _
    // Predicated region
    $region34: #{tpu_custom_call.1} parent=1 // pred_check
      _
    $region35: #{tpu_custom_call.1} parent=1 // pred_check_branch
      %72 = sbr.rel (0) target = $region37
    $region36: #{tpu_custom_call.1} parent=1 // pred_region
      %73 = dma.done [#allocation9], 1024
    $region37: #{tpu_custom_call.1} parent=1 // pred_fallthru
      _
    %v75 = vld [vmem:[#allocation2] sm:$0xf]
    %v76 = vld [vmem:[#allocation5] sm:$0xf]
    %v77 = vld [vmem:[#allocation5 + $0x4] sm:$0xf]
    %v78 = vld [vmem:[%s4] sm:$0x1]
    %v79 = vlaneseq
    %v80 = vshrl.u32 %v79, 7
    %v81 = vsub.s32 0, %v80
    %v82 = vrot.slane %v78, %v81
    %v85 = vunpack.c.l.b16 %v76
    %v86 = vunpack.c.l.b16 %v77
    %v87 = vpack.c.b16 %v86, %v85
    %vm89 = vcmask 130048
    %v91 = vsel %vm89, %v75, 0
    %93 = vmatprep.subr.bf16.mxu0 0
    %94 = vmatpush1.bf16.msra.mxu0 0
    %95 = vmatprep.subr.bf16.mxu0 0
    %96 = vmatpush1.bf16.msra.mxu0 0
    %97 = vmatprep.subr.bf16.mxu0 0
    %98 = vmatpush1.bf16.msra.mxu0 0
    %99 = vmatprep.subr.bf16.mxu0 0
    %100 = vmatpush1.bf16.msra.mxu0 0
    %101 = vmatprep.subr.bf16.mxu0 0
    %102 = vmatpush1.bf16.msra.mxu0 0
    %103 = vmatprep.subr.bf16.mxu0 0
    %104 = vmatpush1.bf16.msra.mxu0 0
    %105 = vmatprep.subr.bf16.mxu0 0
    %106 = vmatpush1.bf16.msra.mxu0 0
    %107 = vmatprep.subr.bf16.mxu0 0
    %108 = vmatpush1.bf16.msra.mxu0 %v87
    %109 = vmatprep.subr.bf16.mxu0 0
    %110 = vmatpush2.bf16.msra.mxu0 0
    %111 = vmatprep.subr.bf16.mxu0 0
    %112 = vmatpush2.bf16.msra.mxu0 0
    %113 = vmatprep.subr.bf16.mxu0 0
    %114 = vmatpush2.bf16.msra.mxu0 0
    %115 = vmatprep.subr.bf16.mxu0 0
    %116 = vmatpush2.bf16.msra.mxu0 0
    %117 = vmatprep.subr.bf16.mxu0 0
    %118 = vmatpush2.bf16.msra.mxu0 0
    %119 = vmatprep.subr.bf16.mxu0 0
    %120 = vmatpush2.bf16.msra.mxu0 0
    %121 = vmatprep.subr.bf16.mxu0 0
    %122 = vmatpush2.bf16.msra.mxu0 0
    %123 = vmatprep.subr.bf16.mxu0 0
    %124 = vmatpush2.bf16.msra.mxu0 0
    %125 = vmatprep.mubr.bf16.mxu0 0
    %126 = vmatmul.mubr.bf16.gmra.mxu0 %v91
    %v127 = vpop.f32.mrf.mxu0
    %v128 = vadd.f32 %v82, %v127
    %v129 = vpop.f32.mrf.mxu0
    %v130 = vpop.f32.mrf.mxu0
    %v131 = vpop.f32.mrf.mxu0
    %132 = vdwg.mxu0
    %vm133 = vcmp.gt.f32.partialorder %v128, 0.0
    %v134 = vmul.f32 %v128, 0.2
    %v135 = vsel %vm133, %v128, %v134
    %v136 = vpack.c.bf16 %v135, %v135
    %v137 = vld [vmem:[#allocation7] sm:$0xf]
    %v138 = vld [vmem:[#allocation7 + $0x4] sm:$0xf]
    %v139 = vld [vmem:[#allocation7 + $0x8] sm:$0xf]
    %v140 = vld [vmem:[#allocation7 + $0xc] sm:$0xf]
    %v141 = vld [vmem:[#allocation7 + $0x10] sm:$0xf]
    %v142 = vld [vmem:[#allocation7 + $0x14] sm:$0xf]
    %v143 = vld [vmem:[#allocation7 + $0x18] sm:$0xf]
    %v144 = vld [vmem:[#allocation7 + $0x1c] sm:$0xf]
    %v145 = vld [vmem:[#allocation7 + $0x20] sm:$0xf]
    %v146 = vld [vmem:[#allocation7 + $0x24] sm:$0xf]
    %v147 = vld [vmem:[#allocation7 + $0x28] sm:$0xf]
    %v148 = vld [vmem:[#allocation7 + $0x2c] sm:$0xf]
    %v149 = vld [vmem:[#allocation7 + $0x30] sm:$0xf]
    %v150 = vld [vmem:[#allocation7 + $0x34] sm:$0xf]
    %v151 = vld [vmem:[#allocation7 + $0x38] sm:$0xf]
    %v152 = vld [vmem:[#allocation7 + $0x3c] sm:$0xf]
    %v153 = vld [vmem:[%s4 + $0x1] sm:$0x1]
    %v154 = vlaneseq
    %v155 = vshrl.u32 %v154, 7
    %v156 = vsub.s32 0, %v155
    %v157 = vrot.slane %v153, %v156
    %v174 = vunpack.c.l.b16 %v137
    %v175 = vunpack.c.l.b16 %v138
    %v176 = vunpack.c.l.b16 %v139
    %v177 = vunpack.c.l.b16 %v140
    %v178 = vunpack.c.l.b16 %v141
    %v179 = vunpack.c.l.b16 %v142
    %v180 = vunpack.c.l.b16 %v143
    %v181 = vunpack.c.l.b16 %v144
    %v182 = vunpack.c.l.b16 %v145
    %v183 = vunpack.c.l.b16 %v146
    %v184 = vunpack.c.l.b16 %v147
    %v185 = vunpack.c.l.b16 %v148
    %v186 = vunpack.c.l.b16 %v149
    %v187 = vunpack.c.l.b16 %v150
    %v188 = vunpack.c.l.b16 %v151
    %v189 = vunpack.c.l.b16 %v152
    %v190 = vpack.c.b16 %v175, %v174
    %v191 = vpack.c.b16 %v177, %v176
    %v192 = vpack.c.b16 %v179, %v178
    %v193 = vpack.c.b16 %v181, %v180
    %v194 = vpack.c.b16 %v183, %v182
    %v195 = vpack.c.b16 %v185, %v184
    %v196 = vpack.c.b16 %v187, %v186
    %v197 = vpack.c.b16 %v189, %v188
    %206 = vmatprep.subr.bf16.mxu0 0
    %207 = vmatpush1.bf16.msra.mxu0 %v197
    %208 = vmatprep.subr.bf16.mxu0 0
    %209 = vmatpush1.bf16.msra.mxu0 %v196
    %210 = vmatprep.subr.bf16.mxu0 0
    %211 = vmatpush1.bf16.msra.mxu0 %v195
    %212 = vmatprep.subr.bf16.mxu0 0
    %213 = vmatpush1.bf16.msra.mxu0 %v194
    %214 = vmatprep.subr.bf16.mxu0 0
    %215 = vmatpush1.bf16.msra.mxu0 %v193
    %216 = vmatprep.subr.bf16.mxu0 0
    %217 = vmatpush1.bf16.msra.mxu0 %v192
    %218 = vmatprep.subr.bf16.mxu0 0
    %219 = vmatpush1.bf16.msra.mxu0 %v191
    %220 = vmatprep.subr.bf16.mxu0 0
    %221 = vmatpush1.bf16.msra.mxu0 %v190
    %222 = vmatprep.subr.bf16.mxu0 0
    %223 = vmatpush2.bf16.msra.mxu0 0
    %224 = vmatprep.subr.bf16.mxu0 0
    %225 = vmatpush2.bf16.msra.mxu0 0
    %226 = vmatprep.subr.bf16.mxu0 0
    %227 = vmatpush2.bf16.msra.mxu0 0
    %228 = vmatprep.subr.bf16.mxu0 0
    %229 = vmatpush2.bf16.msra.mxu0 0
    %230 = vmatprep.subr.bf16.mxu0 0
    %231 = vmatpush2.bf16.msra.mxu0 0
    %232 = vmatprep.subr.bf16.mxu0 0
    %233 = vmatpush2.bf16.msra.mxu0 0
    %234 = vmatprep.subr.bf16.mxu0 0
    %235 = vmatpush2.bf16.msra.mxu0 0
    %236 = vmatprep.subr.bf16.mxu0 0
    %237 = vmatpush2.bf16.msra.mxu0 0
    %238 = vmatprep.mubr.bf16.mxu0 0
    %239 = vmatmul.mubr.bf16.gmra.mxu0 %v136
    %v240 = vpop.f32.mrf.mxu0
    %v241 = vadd.f32 %v157, %v240
    %v242 = vpop.f32.mrf.mxu0
    %v243 = vpop.f32.mrf.mxu0
    %v244 = vpop.f32.mrf.mxu0
    %245 = vdwg.mxu0
    %vm246 = vcmp.gt.f32.partialorder %v241, 0.0
    %v247 = vmul.f32 %v241, 0.2
    %v248 = vsel %vm246, %v241, %v247
    %v249 = vpack.c.bf16 %v248, %v248
    %v250 = vld [vmem:[#allocation8] sm:$0xf]
    %v251 = vld [vmem:[#allocation8 + $0x4] sm:$0xf]
    %v252 = vld [vmem:[#allocation8 + $0x8] sm:$0xf]
    %v253 = vld [vmem:[#allocation8 + $0xc] sm:$0xf]
    %v254 = vld [vmem:[#allocation8 + $0x10] sm:$0xf]
    %v255 = vld [vmem:[#allocation8 + $0x14] sm:$0xf]
    %v256 = vld [vmem:[#allocation8 + $0x18] sm:$0xf]
    %v257 = vld [vmem:[#allocation8 + $0x1c] sm:$0xf]
    %v258 = vld [vmem:[#allocation8 + $0x20] sm:$0xf]
    %v259 = vld [vmem:[#allocation8 + $0x24] sm:$0xf]
    %v260 = vld [vmem:[#allocation8 + $0x28] sm:$0xf]
    %v261 = vld [vmem:[#allocation8 + $0x2c] sm:$0xf]
    %v262 = vld [vmem:[#allocation8 + $0x30] sm:$0xf]
    %v263 = vld [vmem:[#allocation8 + $0x34] sm:$0xf]
    %v264 = vld [vmem:[#allocation8 + $0x38] sm:$0xf]
    %v265 = vld [vmem:[#allocation8 + $0x3c] sm:$0xf]
    %v266 = vld [vmem:[%s4 + $0x2] sm:$0x1]
    %v267 = vlaneseq
    %v268 = vshrl.u32 %v267, 7
    %v269 = vsub.s32 0, %v268
    %v270 = vrot.slane %v266, %v269
    %v287 = vunpack.c.l.b16 %v250
    %v288 = vunpack.c.l.b16 %v251
    %v289 = vunpack.c.l.b16 %v252
    %v290 = vunpack.c.l.b16 %v253
    %v291 = vunpack.c.l.b16 %v254
    %v292 = vunpack.c.l.b16 %v255
    %v293 = vunpack.c.l.b16 %v256
    %v294 = vunpack.c.l.b16 %v257
    %v295 = vunpack.c.l.b16 %v258
    %v296 = vunpack.c.l.b16 %v259
    %v297 = vunpack.c.l.b16 %v260
    %v298 = vunpack.c.l.b16 %v261
    %v299 = vunpack.c.l.b16 %v262
    %v300 = vunpack.c.l.b16 %v263
    %v301 = vunpack.c.l.b16 %v264
    %v302 = vunpack.c.l.b16 %v265
    %v303 = vpack.c.b16 %v288, %v287
    %v304 = vpack.c.b16 %v290, %v289
    %v305 = vpack.c.b16 %v292, %v291
    %v306 = vpack.c.b16 %v294, %v293
    %v307 = vpack.c.b16 %v296, %v295
    %v308 = vpack.c.b16 %v298, %v297
    %v309 = vpack.c.b16 %v300, %v299
    %v310 = vpack.c.b16 %v302, %v301
    %319 = vmatprep.subr.bf16.mxu0 0
    %320 = vmatpush1.bf16.msra.mxu0 %v310
    %321 = vmatprep.subr.bf16.mxu0 0
    %322 = vmatpush1.bf16.msra.mxu0 %v309
    %323 = vmatprep.subr.bf16.mxu0 0
    %324 = vmatpush1.bf16.msra.mxu0 %v308
    %325 = vmatprep.subr.bf16.mxu0 0
    %326 = vmatpush1.bf16.msra.mxu0 %v307
    %327 = vmatprep.subr.bf16.mxu0 0
    %328 = vmatpush1.bf16.msra.mxu0 %v306
    %329 = vmatprep.subr.bf16.mxu0 0
    %330 = vmatpush1.bf16.msra.mxu0 %v305
    %331 = vmatprep.subr.bf16.mxu0 0
    %332 = vmatpush1.bf16.msra.mxu0 %v304
    %333 = vmatprep.subr.bf16.mxu0 0
    %334 = vmatpush1.bf16.msra.mxu0 %v303
    %335 = vmatprep.subr.bf16.mxu0 0
    %336 = vmatpush2.bf16.msra.mxu0 0
    %337 = vmatprep.subr.bf16.mxu0 0
    %338 = vmatpush2.bf16.msra.mxu0 0
    %339 = vmatprep.subr.bf16.mxu0 0
    %340 = vmatpush2.bf16.msra.mxu0 0
    %341 = vmatprep.subr.bf16.mxu0 0
    %342 = vmatpush2.bf16.msra.mxu0 0
    %343 = vmatprep.subr.bf16.mxu0 0
    %344 = vmatpush2.bf16.msra.mxu0 0
    %345 = vmatprep.subr.bf16.mxu0 0
    %346 = vmatpush2.bf16.msra.mxu0 0
    %347 = vmatprep.subr.bf16.mxu0 0
    %348 = vmatpush2.bf16.msra.mxu0 0
    %349 = vmatprep.subr.bf16.mxu0 0
    %350 = vmatpush2.bf16.msra.mxu0 0
    %351 = vmatprep.mubr.bf16.mxu0 0
    %352 = vmatmul.mubr.bf16.gmra.mxu0 %v249
    %v353 = vpop.f32.mrf.mxu0
    %v354 = vadd.f32 %v270, %v353
    %v355 = vpop.f32.mrf.mxu0
    %v356 = vpop.f32.mrf.mxu0
    %v357 = vpop.f32.mrf.mxu0
    %358 = vdwg.mxu0
    %359 = vst [vmem:[#allocation10] sm:$0xff] %v354
    // Predicated region
    $region38: #{tpu_custom_call.1} parent=1 // pred_check
      _
    $region39: #{tpu_custom_call.1} parent=1 // pred_check_branch
      %361 = sbr.rel (0) target = $region41
    $region40: #{tpu_custom_call.1} parent=1 // pred_region
      %s363 = ssub.s32 128, 128
      %364 = vsyncadd [#allocation4], %s363
      %s366 = sshll.u32 [#allocation10], 4
      %s367 = int_to_ptr.vmem [resolvable:$true] %s366
      %369 = dma.vmem_to_hbm [thread:$0]  %s367, 128, %s5, [#allocation4]
    $region41: #{tpu_custom_call.1} parent=1 // pred_fallthru
      _
    // Predicated region
    $region42: #{tpu_custom_call.1} parent=1 // pred_check
      _
    $region43: #{tpu_custom_call.1} parent=1 // pred_check_branch
      %371 = sbr.rel (0) target = $region45
    $region44: #{tpu_custom_call.1} parent=1 // pred_region
      %372 = dma.done [#allocation4], 128
    $region45: #{tpu_custom_call.1} parent=1 // pred_fallthru
      _
    %373 = vsyncpa [#allocation3], 1
    %374 = vsyncpa [#allocation6], 1
    %375 = vsyncpa [#allocation9], 1
    %376 = vsyncpa [#allocation4], 1

</llo_original>
